<compile_context>
chip_gen: v7x
topology: tpu7x:2x2x1
jax: 0.10.0
libtpu: 0.0.40
codegen_flags: <defaults>
</compile_context>

<pallas_src>
import functools

import jax
import jax.numpy as jnp
from jax.experimental import pallas as pl
from jax.experimental.pallas import tpu as pltpu


# Above the 16/32 MiB scoped defaults (v5e / v6e,v7x), below v7x's 64 MiB physical.
_VMEM_LIMIT = 48 * 1024 * 1024


def _hardswish(y):
    # Hardswish: x * relu6(x + 3) / 6   (done in f32 on the accumulator)
    return y * jnp.clip(y + 3.0, 0.0, 6.0) * (1.0 / 6.0)


# ---------------------------------------------------------------------------
# Kernel 1: fused multi-input matmul + bias + Hardswish  (1x1 convs, cv7-on-cat)
# ---------------------------------------------------------------------------
def _mm_bias_act_kernel(*refs, n_in, act):
    a_refs = refs[:n_in]
    w_refs = refs[n_in:2 * n_in]
    b_ref = refs[2 * n_in]
    o_ref = refs[2 * n_in + 1]
    y = jnp.dot(a_refs[0][...], w_refs[0][...], preferred_element_type=jnp.float32)
    for i in range(1, n_in):
        y = y + jnp.dot(a_refs[i][...], w_refs[i][...],
                        preferred_element_type=jnp.float32)
    y = y + b_ref[...]
    if act:
        y = _hardswish(y)
    o_ref[...] = y.astype(o_ref.dtype)


def matmul_bias_act(a_list, w_list, b, *, act=True, out_dtype=jnp.bfloat16, tm=512):
    """hardswish(sum_i a_i @ w_i + b).  a_i: (M, K_i) bf16, w_i: (K_i, Cout) bf16."""
    M = a_list[0].shape[0]
    Cout = w_list[0].shape[1]
    tm = tm if M >= tm else M
    Mp = pl.cdiv(M, tm) * tm
    pad = Mp - M
    if pad:  # fallback only; typical YOLO feature maps make M a multiple of tm
        a_list = [jnp.pad(a, ((0, pad), (0, 0))) for a in a_list]
    n = len(a_list)
    in_specs = (
        [pl.BlockSpec((tm, a.shape[1]), lambda i: (i, 0)) for a in a_list]
        + [pl.BlockSpec(w.shape, lambda i: (0, 0)) for w in w_list]
        + [pl.BlockSpec((1, Cout), lambda i: (0, 0))]
    )
    out = pl.pallas_call(
        functools.partial(_mm_bias_act_kernel, n_in=n, act=act),
        out_shape=jax.ShapeDtypeStruct((Mp, Cout), out_dtype),
        grid=(Mp // tm,),
        in_specs=in_specs,
        out_specs=pl.BlockSpec((tm, Cout), lambda i: (i, 0)),
        compiler_params=pltpu.CompilerParams(
            dimension_semantics=("parallel",),
            vmem_limit_bytes=_VMEM_LIMIT),
    )(*a_list, *w_list, b.reshape(1, Cout).astype(jnp.float32))
    return out[:M] if pad else out


# ---------------------------------------------------------------------------
# Kernel 2: 3x3 conv (stride 1, same zero pad) as 9 shifted in-kernel matmuls
# ---------------------------------------------------------------------------
def _conv3x3_kernel(x_ref, w_ref, b_ref, o_ref, *, H, W, Cin, Cout, act):
    xp = x_ref[0]                                  # (H+2, W+2, Cin) bf16, zero-padded
    acc = None
    for kh in range(3):
        for kw in range(3):
            a = xp[kh:kh + H, kw:kw + W, :].reshape(H * W, Cin)
            d = jnp.dot(a, w_ref[kh * 3 + kw], preferred_element_type=jnp.float32)
            acc = d if acc is None else acc + d
    y = acc + b_ref[...]
    if act:
        y = _hardswish(y)
    o_ref[0] = y.reshape(H, W, Cout).astype(o_ref.dtype)


def conv3x3(x, p, *, act=True, out_dtype=jnp.bfloat16):
    # TODO(synk): for large feature maps, tile the grid over rows/channels with a
    # 1-row halo instead of one whole image per grid step (v7x 64 MiB VMEM).
    N, H, W, Cin = x.shape
    Cout = p["b"].shape[0]
    xp = jnp.pad(x, ((0, 0), (1, 1), (1, 1), (0, 0)))   # zero 'same' padding (halo)
    return pl.pallas_call(
        functools.partial(_conv3x3_kernel, H=H, W=W, Cin=Cin, Cout=Cout, act=act),
        out_shape=jax.ShapeDtypeStruct((N, H, W, Cout), out_dtype),
        grid=(N,),
        in_specs=[
            pl.BlockSpec((1, H + 2, W + 2, Cin), lambda n: (n, 0, 0, 0)),
            pl.BlockSpec((9, Cin, Cout), lambda n: (0, 0, 0)),
            pl.BlockSpec((1, Cout), lambda n: (0, 0)),
        ],
        out_specs=pl.BlockSpec((1, H, W, Cout), lambda n: (n, 0, 0, 0)),
        compiler_params=pltpu.CompilerParams(
            dimension_semantics=("parallel",),
            vmem_limit_bytes=_VMEM_LIMIT),
    )(xp, p["w"], p["b"].reshape(1, Cout).astype(jnp.float32))


# ---------------------------------------------------------------------------
# Kernel 3: fused SPP (maxpool 5/9/13 via cascaded 5-wide max) + concat + cv5
# ---------------------------------------------------------------------------
def _spp_cv5_kernel(x_ref, w_ref, b_ref, o_ref, *, H, W, C, Cout):
    xp = x_ref[0]                                  # (H+12, W+12, C) bf16, -big padded

    def pool5(buf, hout, wout):                    # separable 5x5 running max
        rows = buf[0:hout]
        for d in range(1, 5):
            rows = jnp.maximum(rows, buf[d:d + hout])
        out = rows[:, 0:wout]
        for d in range(1, 5):
            out = jnp.maximum(out, rows[:, d:d + wout])
        return out

    p5 = pool5(xp, H + 8, W + 8)                   # 5x5 max of xp
    p9 = pool5(p5, H + 4, W + 4)                   # == 9x9 max of xp (cascaded)
    p13 = pool5(p9, H, W)                          # == 13x13 max of xp (cascaded)
    branches = (
        xp[6:6 + H, 6:6 + W, :],                   # identity branch (torch.cat order)
        p5[4:4 + H, 4:4 + W, :],
        p9[2:2 + H, 2:2 + W, :],
        p13,
    )
    acc = None                                     # cv5 with K split per branch
    for idx, br in enumerate(branches):
        a = br.reshape(H * W, C)
        d = jnp.dot(a, w_ref[idx], preferred_element_type=jnp.float32)
        acc = d if acc is None else acc + d
    y = _hardswish(acc + b_ref[...])
    o_ref[0] = y.reshape(H, W, Cout).astype(o_ref.dtype)


def spp_cv5(x1, p, *, out_dtype=jnp.bfloat16):
    # TODO(synk): for large feature maps, tile the grid over channels (pooling is
    # per-channel) to stay inside v7x's 64 MiB VMEM.
    N, H, W, C = x1.shape
    Cout = p["b"].shape[0]
    pad = 6                                        # halo for the largest pool (13 // 2)
    neg = float(jnp.finfo(x1.dtype).min)           # matches PyTorch -inf pool padding
    xp = jnp.pad(x1, ((0, 0), (pad, pad), (pad, pad), (0, 0)), constant_values=neg)
    return pl.pallas_call(
        functools.partial(_spp_cv5_kernel, H=H, W=W, C=C, Cout=Cout),
        out_shape=jax.ShapeDtypeStruct((N, H, W, Cout), out_dtype),
        grid=(N,),
        in_specs=[
            pl.BlockSpec((1, H + 2 * pad, W + 2 * pad, C), lambda n: (n, 0, 0, 0)),
            pl.BlockSpec((4, C, Cout), lambda n: (0, 0, 0)),
            pl.BlockSpec((1, Cout), lambda n: (0, 0)),
        ],
        out_specs=pl.BlockSpec((1, H, W, Cout), lambda n: (n, 0, 0, 0)),
        compiler_params=pltpu.CompilerParams(
            dimension_semantics=("parallel",),
            vmem_limit_bytes=_VMEM_LIMIT),
    )(xp, p["w"], p["b"].reshape(1, Cout).astype(jnp.float32))


# ---------------------------------------------------------------------------
# Conv wrappers built on the matmul kernel
# ---------------------------------------------------------------------------
def conv1x1(x, p, *, act=True, out_dtype=jnp.bfloat16):
    N, H, W, Cin = x.shape
    out = matmul_bias_act([x.reshape(N * H * W, Cin)], [p["w"]], p["b"],
                          act=act, out_dtype=out_dtype)
    return out.reshape(N, H, W, -1)


def conv1x1_concat2(a, b, p, *, act=True, out_dtype=jnp.float32):
    """cv7(cat([a, b], channels)) without materializing the concat."""
    N, H, W, Ca = a.shape
    Cb = b.shape[-1]
    out = matmul_bias_act([a.reshape(N * H * W, Ca), b.reshape(N * H * W, Cb)],
                          [p["w1"], p["w2"]], p["b"], act=act, out_dtype=out_dtype)
    return out.reshape(N, H, W, -1)


# ---------------------------------------------------------------------------
# Parameters: Conv2d weight + eval-mode BatchNorm folded together (bf16 weights)
# ---------------------------------------------------------------------------
def _fold_conv_bn(key, cin, cout, k):
    kw_, kg, kb, km, kv = jax.random.split(key, 5)
    w = 0.1 * jax.random.normal(kw_, (k, k, cin, cout), jnp.float32)
    gamma = 1.0 + 0.1 * jax.random.normal(kg, (cout,), jnp.float32)
    beta = 0.1 * jax.random.normal(kb, (cout,), jnp.float32)
    mean = 0.1 * jax.random.normal(km, (cout,), jnp.float32)
    var = 1.0 + 0.1 * jax.random.uniform(kv, (cout,), jnp.float32)
    eps = 1e-5  # nn.BatchNorm2d default
    scale = gamma / jnp.sqrt(var + eps)
    return w * scale, beta - mean * scale


def make_sppcspc_params(key, c1, c2, e=0.5):
    c_ = int(2 * c2 * e)
    ks = jax.random.split(key, 7)
    w1, b1 = _fold_conv_bn(ks[0], c1, c_, 1)
    w2, b2 = _fold_conv_bn(ks[1], c1, c_, 1)
    w3, b3 = _fold_conv_bn(ks[2], c_, c_, 3)
    w4, b4 = _fold_conv_bn(ks[3], c_, c_, 1)
    w5, b5 = _fold_conv_bn(ks[4], 4 * c_, c_, 1)
    w6, b6 = _fold_conv_bn(ks[5], c_, c_, 3)
    w7, b7 = _fold_conv_bn(ks[6], 2 * c_, c2, 1)
    bf = jnp.bfloat16
    w7s = w7.reshape(2, c_, c2)
    return {
        "cv1": {"w": w1.reshape(c1, c_).astype(bf), "b": b1},
        "cv2": {"w": w2.reshape(c1, c_).astype(bf), "b": b2},
        "cv3": {"w": w3.reshape(9, c_, c_).astype(bf), "b": b3},
        "cv4": {"w": w4.reshape(c_, c_).astype(bf), "b": b4},
        # cv5 consumes cat([x1, pool5, pool9, pool13]); split K into 4 branch blocks.
        "cv5": {"w": w5.reshape(4, c_, c_).astype(bf), "b": b5},
        "cv6": {"w": w6.reshape(9, c_, c_).astype(bf), "b": b6},
        # cv7 consumes cat([y1, y2]); split K into the y1 and y2 halves.
        "cv7": {"w1": w7s[0].astype(bf), "w2": w7s[1].astype(bf), "b": b7},
    }


# ---------------------------------------------------------------------------
# SPPCSPC forward (interface matches PyTorch: NCHW in, NCHW out)
# ---------------------------------------------------------------------------
def sppcspc_forward(x_nchw, params, k=(5, 9, 13)):
    assert k == (5, 9, 13), "fused SPP kernel is specialized for the default k=(5,9,13)"
    x = jnp.transpose(x_nchw, (0, 2, 3, 1)).astype(jnp.bfloat16)   # NCHW -> NHWC, bf16

    x1 = conv1x1(x, params["cv1"])
    x1 = conv3x3(x1, params["cv3"])
    x1 = conv1x1(x1, params["cv4"])

    y1 = spp_cv5(x1, params["cv5"])          # maxpools(5,9,13) + concat + cv5, fused
    y1 = conv3x3(y1, params["cv6"])
    y2 = conv1x1(x, params["cv2"])

    out = conv1x1_concat2(y1, y2, params["cv7"], out_dtype=jnp.float32)  # cv7 on cat
    return jnp.transpose(out, (0, 3, 1, 2))  # NHWC -> NCHW (f32)


if __name__ == "__main__":
    key = jax.random.PRNGKey(0)
    kx, kp = jax.random.split(key)

    # Small shapes consistent with the module: N=2, c1=4, H=W=16, c2=4.
    N, c1, H, W = 2, 4, 16, 16
    c2 = 4
    x = jax.random.normal(kx, (N, c1, H, W), jnp.float32)   # NCHW like PyTorch

    params = make_sppcspc_params(kp, c1, c2)
    out = jax.block_until_ready(sppcspc_forward(x, params))

    expected_shape = (N, c2, H, W)
    assert out.shape == expected_shape, (out.shape, expected_shape)
    assert bool(jnp.all(jnp.isfinite(out)))
    print("KERNEL_OK")
</pallas_src>

<mosaic_0001>
module attributes {stable_mosaic.version = 11 : i64} {
  func.func @_mm_bias_act_kernel(%arg0: i32, %arg1: memref<512x4xbf16, #tpu.memory_space<vmem>>, %arg2: memref<4x4xbf16, #tpu.memory_space<vmem>>, %arg3: memref<1x4xf32, #tpu.memory_space<vmem>>, %arg4: memref<512x4xbf16, #tpu.memory_space<vmem>>) attributes {dimension_semantics = [#tpu.dimension_semantics<parallel>], iteration_bounds = array<i64: 1>, scalar_prefetch = 0 : i64, scratch_operands = 0 : i64, tpu.core_type = #tpu.core_type<tc>, window_params = [{transform_indices = @transform_0, window_bounds = array<i64: 512, 4>}, {pipeline_mode = #tpu.pipeline_mode<synchronous>, transform_indices = @transform_1, window_bounds = array<i64: 4, 4>}, {pipeline_mode = #tpu.pipeline_mode<synchronous>, transform_indices = @transform_2, window_bounds = array<i64: 1, 4>}, {transform_indices = @transform_3, window_bounds = array<i64: 512, 4>}]} {
    %c0 = arith.constant 0 : index
    %c0_0 = arith.constant 0 : index
    %0 = vector.load %arg1[%c0, %c0_0] : memref<512x4xbf16, #tpu.memory_space<vmem>>, vector<512x4xbf16>
    %c0_1 = arith.constant 0 : index
    %c0_2 = arith.constant 0 : index
    %1 = vector.load %arg2[%c0_1, %c0_2] : memref<4x4xbf16, #tpu.memory_space<vmem>>, vector<4x4xbf16>
    %cst = arith.constant dense<0.000000e+00> : vector<512x4xf32>
    %2 = tpu.matmul %0, %1, %cst {dimension_numbers = #tpu.dot_dimension_numbers<[1], [0], [0], [1], [0, 0, 1, 1], [], []>} : vector<512x4xbf16>, vector<4x4xbf16>, vector<512x4xf32> -> vector<512x4xf32>
    %c0_3 = arith.constant 0 : index
    %c0_4 = arith.constant 0 : index
    %3 = vector.load %arg3[%c0_3, %c0_4] : memref<1x4xf32, #tpu.memory_space<vmem>>, vector<1x4xf32>
    %4 = vector.broadcast %3 : vector<1x4xf32> to vector<512x4xf32>
    %5 = arith.addf %2, %4 : vector<512x4xf32>
    %cst_5 = arith.constant 3.000000e+00 : f32
    %6 = vector.broadcast %cst_5 : f32 to vector<512x4xf32>
    %7 = arith.addf %5, %6 : vector<512x4xf32>
    %cst_6 = arith.constant 0.000000e+00 : f32
    %cst_7 = arith.constant 6.000000e+00 : f32
    %8 = vector.broadcast %cst_6 : f32 to vector<512x4xf32>
    %9 = arith.maximumf %8, %7 : vector<512x4xf32>
    %10 = vector.broadcast %cst_7 : f32 to vector<512x4xf32>
    %11 = arith.minimumf %10, %9 : vector<512x4xf32>
    %12 = arith.mulf %5, %11 : vector<512x4xf32>
    %cst_8 = arith.constant 0.166666672 : f32
    %13 = vector.broadcast %cst_8 : f32 to vector<512x4xf32>
    %14 = arith.mulf %12, %13 : vector<512x4xf32>
    %15 = arith.truncf %14 : vector<512x4xf32> to vector<512x4xbf16>
    %c0_9 = arith.constant 0 : index
    %c0_10 = arith.constant 0 : index
    %16 = vector.load %arg4[%c0_9, %c0_10] : memref<512x4xbf16, #tpu.memory_space<vmem>>, vector<512x4xbf16>
    tpu.vector_store %arg4[%c0_9, %c0_10], %15 {strides = array<i32>} : memref<512x4xbf16, #tpu.memory_space<vmem>>, vector<512x4xbf16>,
    return
  }
  func.func @transform_0(%arg0: i32) -> (i32, i32) {
    %c0_i32 = arith.constant 0 : i32
    %c0_i32_0 = arith.constant 0 : i32
    return %arg0, %c0_i32 : i32, i32
  }
  func.func @transform_1(%arg0: i32) -> (i32, i32) {
    %c0_i32 = arith.constant 0 : i32
    %c0_i32_0 = arith.constant 0 : i32
    %c0_i32_1 = arith.constant 0 : i32
    return %c0_i32, %c0_i32_0 : i32, i32
  }
  func.func @transform_2(%arg0: i32) -> (i32, i32) {
    %c0_i32 = arith.constant 0 : i32
    %c0_i32_0 = arith.constant 0 : i32
    %c0_i32_1 = arith.constant 0 : i32
    return %c0_i32, %c0_i32_0 : i32, i32
  }
  func.func @transform_3(%arg0: i32) -> (i32, i32) {
    %c0_i32 = arith.constant 0 : i32
    %c0_i32_0 = arith.constant 0 : i32
    return %arg0, %c0_i32 : i32, i32
  }
}

</mosaic_0001>

<llo_original>
// kernel: tpu_custom_call.1
$region0: #{tpu_custom_call.1}
  #allocation0 [shape = 'u32[]', space=smem, size = 0x4, offset = 0x4, fixed_abs, tag = 'smem constant byte address 0x4 - core index']
  #allocation1 [shape = 'u32[144,128]{1,0:T(1,128)}', space=vmem, size = 0x12000, scoped, tag = 'internal scratch']
  %s0 = inlined_call_operand.vmem [shape: bf16[512,4], index: 0, kind: input, shape index: {}]
  %s1 = inlined_call_operand.vmem [shape: bf16[4,4], index: 1, kind: input, shape index: {}]
  %s2 = inlined_call_operand.vmem [shape: f32[1,4], index: 2, kind: input, shape index: {}]
  %s3 = inlined_call_operand.vmem [shape: bf16[512,4], index: 3, kind: output, shape index: {}]
  %s4 = sld [smem:[#allocation0]]
  $region22: #{tpu_custom_call.1} parent=0
    _
  %s6 = ssub.s32 1, %s4
  %s7 = scalar_select 0, %s6, %s4
  // Predicated region
  $region2: #{tpu_custom_call.1} parent=0 // pred_check
    _
  $region3: #{tpu_custom_call.1} parent=0 // pred_check_branch
    %9 = sbr.rel (0) target = $region5
  $region4: #{tpu_custom_call.1} parent=0 // pred_region
    _
  $region5: #{tpu_custom_call.1} parent=0 // pred_fallthru
    _
  // Predicated region
  $region6: #{tpu_custom_call.1} parent=0 // pred_check
    _
  $region7: #{tpu_custom_call.1} parent=0 // pred_check_branch
    %11 = sbr.rel (0) target = $region9
  $region8: #{tpu_custom_call.1} parent=0 // pred_region
    _
  $region9: #{tpu_custom_call.1} parent=0 // pred_fallthru
    _
  // Predicated region
  $region10: #{tpu_custom_call.1} parent=0 // pred_check
    _
  $region11: #{tpu_custom_call.1} parent=0 // pred_check_branch
    %13 = sbr.rel (0) target = $region13
  $region12: #{tpu_custom_call.1} parent=0 // pred_region
    _
  $region13: #{tpu_custom_call.1} parent=0 // pred_fallthru
    _
  %v15 = vld [vmem:[%s0] sm:$0xf]
  %v16 = vld [vmem:[%s0 + $0x4] sm:$0xf]
  %v17 = vld [vmem:[%s0 + $0x8] sm:$0xf]
  %v18 = vld [vmem:[%s0 + $0xc] sm:$0xf]
  %v19 = vld [vmem:[%s0 + $0x10] sm:$0xf]
  %v20 = vld [vmem:[%s0 + $0x14] sm:$0xf]
  %v21 = vld [vmem:[%s0 + $0x18] sm:$0xf]
  %v22 = vld [vmem:[%s0 + $0x1c] sm:$0xf]
  %v23 = vld [vmem:[%s0 + $0x20] sm:$0xf]
  %v24 = vld [vmem:[%s0 + $0x24] sm:$0xf]
  %v25 = vld [vmem:[%s0 + $0x28] sm:$0xf]
  %v26 = vld [vmem:[%s0 + $0x2c] sm:$0xf]
  %v27 = vld [vmem:[%s0 + $0x30] sm:$0xf]
  %v28 = vld [vmem:[%s0 + $0x34] sm:$0xf]
  %v29 = vld [vmem:[%s0 + $0x38] sm:$0xf]
  %v30 = vld [vmem:[%s0 + $0x3c] sm:$0xf]
  %v31 = vld [vmem:[%s0 + $0x40] sm:$0xf]
  %v32 = vld [vmem:[%s0 + $0x44] sm:$0xf]
  %v33 = vld [vmem:[%s0 + $0x48] sm:$0xf]
  %v34 = vld [vmem:[%s0 + $0x4c] sm:$0xf]
  %v35 = vld [vmem:[%s0 + $0x50] sm:$0xf]
  %v36 = vld [vmem:[%s0 + $0x54] sm:$0xf]
  %v37 = vld [vmem:[%s0 + $0x58] sm:$0xf]
  %v38 = vld [vmem:[%s0 + $0x5c] sm:$0xf]
  %v39 = vld [vmem:[%s0 + $0x60] sm:$0xf]
  %v40 = vld [vmem:[%s0 + $0x64] sm:$0xf]
  %v41 = vld [vmem:[%s0 + $0x68] sm:$0xf]
  %v42 = vld [vmem:[%s0 + $0x6c] sm:$0xf]
  %v43 = vld [vmem:[%s0 + $0x70] sm:$0xf]
  %v44 = vld [vmem:[%s0 + $0x74] sm:$0xf]
  %v45 = vld [vmem:[%s0 + $0x78] sm:$0xf]
  %v46 = vld [vmem:[%s0 + $0x7c] sm:$0xf]
  %v47 = vld [vmem:[%s0 + $0x80] sm:$0xf]
  %v48 = vld [vmem:[%s0 + $0x84] sm:$0xf]
  %v49 = vld [vmem:[%s0 + $0x88] sm:$0xf]
  %v50 = vld [vmem:[%s0 + $0x8c] sm:$0xf]
  %v51 = vld [vmem:[%s0 + $0x90] sm:$0xf]
  %v52 = vld [vmem:[%s0 + $0x94] sm:$0xf]
  %v53 = vld [vmem:[%s0 + $0x98] sm:$0xf]
  %v54 = vld [vmem:[%s0 + $0x9c] sm:$0xf]
  %v55 = vld [vmem:[%s0 + $0xa0] sm:$0xf]
  %v56 = vld [vmem:[%s0 + $0xa4] sm:$0xf]
  %v57 = vld [vmem:[%s0 + $0xa8] sm:$0xf]
  %v58 = vld [vmem:[%s0 + $0xac] sm:$0xf]
  %v59 = vld [vmem:[%s0 + $0xb0] sm:$0xf]
  %v60 = vld [vmem:[%s0 + $0xb4] sm:$0xf]
  %v61 = vld [vmem:[%s0 + $0xb8] sm:$0xf]
  %v62 = vld [vmem:[%s0 + $0xbc] sm:$0xf]
  %v63 = vld [vmem:[%s0 + $0xc0] sm:$0xf]
  %v64 = vld [vmem:[%s0 + $0xc4] sm:$0xf]
  %v65 = vld [vmem:[%s0 + $0xc8] sm:$0xf]
  %v66 = vld [vmem:[%s0 + $0xcc] sm:$0xf]
  %v67 = vld [vmem:[%s0 + $0xd0] sm:$0xf]
  %v68 = vld [vmem:[%s0 + $0xd4] sm:$0xf]
  %v69 = vld [vmem:[%s0 + $0xd8] sm:$0xf]
  %v70 = vld [vmem:[%s0 + $0xdc] sm:$0xf]
  %v71 = vld [vmem:[%s0 + $0xe0] sm:$0xf]
  %v72 = vld [vmem:[%s0 + $0xe4] sm:$0xf]
  %v73 = vld [vmem:[%s0 + $0xe8] sm:$0xf]
  %v74 = vld [vmem:[%s0 + $0xec] sm:$0xf]
  %v75 = vld [vmem:[%s0 + $0xf0] sm:$0xf]
  %v76 = vld [vmem:[%s0 + $0xf4] sm:$0xf]
  %v77 = vld [vmem:[%s0 + $0xf8] sm:$0xf]
  %v78 = vld [vmem:[%s0 + $0xfc] sm:$0xf]
  %v79 = vld [vmem:[%s1] sm:$0x3]
  %v80 = vld [vmem:[%s2] sm:$0x1]
  %v82 = vlaneseq
  %v83 = vshrl.u32 %v82, 7
  %v84 = vsub.s32 0, %v83
  %v85 = vrot.slane %v80, %v84
  %v151 = vunpack.c.l.b16 %v15
  %v152 = vunpack.c.l.b16 %v16
  %v153 = vunpack.c.l.b16 %v17
  %v154 = vunpack.c.l.b16 %v18
  %v155 = vunpack.c.l.b16 %v19
  %v156 = vunpack.c.l.b16 %v20
  %v157 = vunpack.c.l.b16 %v21
  %v158 = vunpack.c.l.b16 %v22
  %v159 = vunpack.c.l.b16 %v23
  %v160 = vunpack.c.l.b16 %v24
  %v161 = vunpack.c.l.b16 %v25
  %v162 = vunpack.c.l.b16 %v26
  %v163 = vunpack.c.l.b16 %v27
  %v164 = vunpack.c.l.b16 %v28
  %v165 = vunpack.c.l.b16 %v29
  %v166 = vunpack.c.l.b16 %v30
  %v167 = vunpack.c.l.b16 %v31
  %v168 = vunpack.c.l.b16 %v32
  %v169 = vunpack.c.l.b16 %v33
  %v170 = vunpack.c.l.b16 %v34
  %v171 = vunpack.c.l.b16 %v35
  %v172 = vunpack.c.l.b16 %v36
  %v173 = vunpack.c.l.b16 %v37
  %v174 = vunpack.c.l.b16 %v38
  %v175 = vunpack.c.l.b16 %v39
  %v176 = vunpack.c.l.b16 %v40
  %v177 = vunpack.c.l.b16 %v41
  %v178 = vunpack.c.l.b16 %v42
  %v179 = vunpack.c.l.b16 %v43
  %v180 = vunpack.c.l.b16 %v44
  %v181 = vunpack.c.l.b16 %v45
  %v182 = vunpack.c.l.b16 %v46
  %v183 = vunpack.c.l.b16 %v47
  %v184 = vunpack.c.l.b16 %v48
  %v185 = vunpack.c.l.b16 %v49
  %v186 = vunpack.c.l.b16 %v50
  %v187 = vunpack.c.l.b16 %v51
  %v188 = vunpack.c.l.b16 %v52
  %v189 = vunpack.c.l.b16 %v53
  %v190 = vunpack.c.l.b16 %v54
  %v191 = vunpack.c.l.b16 %v55
  %v192 = vunpack.c.l.b16 %v56
  %v193 = vunpack.c.l.b16 %v57
  %v194 = vunpack.c.l.b16 %v58
  %v195 = vunpack.c.l.b16 %v59
  %v196 = vunpack.c.l.b16 %v60
  %v197 = vunpack.c.l.b16 %v61
  %v198 = vunpack.c.l.b16 %v62
  %v199 = vunpack.c.l.b16 %v63
  %v200 = vunpack.c.l.b16 %v64
  %v201 = vunpack.c.l.b16 %v65
  %v202 = vunpack.c.l.b16 %v66
  %v203 = vunpack.c.l.b16 %v67
  %v204 = vunpack.c.l.b16 %v68
  %v205 = vunpack.c.l.b16 %v69
  %v206 = vunpack.c.l.b16 %v70
  %v207 = vunpack.c.l.b16 %v71
  %v208 = vunpack.c.l.b16 %v72
  %v209 = vunpack.c.l.b16 %v73
  %v210 = vunpack.c.l.b16 %v74
  %v211 = vunpack.c.l.b16 %v75
  %v212 = vunpack.c.l.b16 %v76
  %v213 = vunpack.c.l.b16 %v77
  %v214 = vunpack.c.l.b16 %v78
  %v215 = vpack.c.b16 %v152, %v151
  %v216 = vpack.c.b16 %v154, %v153
  %v217 = vpack.c.b16 %v156, %v155
  %v218 = vpack.c.b16 %v158, %v157
  %v219 = vpack.c.b16 %v160, %v159
  %v220 = vpack.c.b16 %v162, %v161
  %v221 = vpack.c.b16 %v164, %v163
  %v222 = vpack.c.b16 %v166, %v165
  %v223 = vpack.c.b16 %v168, %v167
  %v224 = vpack.c.b16 %v170, %v169
  %v225 = vpack.c.b16 %v172, %v171
  %v226 = vpack.c.b16 %v174, %v173
  %v227 = vpack.c.b16 %v176, %v175
  %v228 = vpack.c.b16 %v178, %v177
  %v229 = vpack.c.b16 %v180, %v179
  %v230 = vpack.c.b16 %v182, %v181
  %v231 = vpack.c.b16 %v184, %v183
  %v232 = vpack.c.b16 %v186, %v185
  %v233 = vpack.c.b16 %v188, %v187
  %v234 = vpack.c.b16 %v190, %v189
  %v235 = vpack.c.b16 %v192, %v191
  %v236 = vpack.c.b16 %v194, %v193
  %v237 = vpack.c.b16 %v196, %v195
  %v238 = vpack.c.b16 %v198, %v197
  %v239 = vpack.c.b16 %v200, %v199
  %v240 = vpack.c.b16 %v202, %v201
  %v241 = vpack.c.b16 %v204, %v203
  %v242 = vpack.c.b16 %v206, %v205
  %v243 = vpack.c.b16 %v208, %v207
  %v244 = vpack.c.b16 %v210, %v209
  %v245 = vpack.c.b16 %v212, %v211
  %v246 = vpack.c.b16 %v214, %v213
  %vm247 = vcmask 31744
  %v249 = vsel %vm247, %v215, 0
  %v252 = vsel %vm247, %v216, 0
  %v255 = vsel %vm247, %v217, 0
  %v258 = vsel %vm247, %v218, 0
  %v261 = vsel %vm247, %v219, 0
  %v264 = vsel %vm247, %v220, 0
  %v267 = vsel %vm247, %v221, 0
  %v270 = vsel %vm247, %v222, 0
  %v273 = vsel %vm247, %v223, 0
  %v276 = vsel %vm247, %v224, 0
  %v279 = vsel %vm247, %v225, 0
  %v282 = vsel %vm247, %v226, 0
  %v285 = vsel %vm247, %v227, 0
  %v288 = vsel %vm247, %v228, 0
  %v291 = vsel %vm247, %v229, 0
  %v294 = vsel %vm247, %v230, 0
  %v297 = vsel %vm247, %v231, 0
  %v300 = vsel %vm247, %v232, 0
  %v303 = vsel %vm247, %v233, 0
  %v306 = vsel %vm247, %v234, 0
  %v309 = vsel %vm247, %v235, 0
  %v312 = vsel %vm247, %v236, 0
  %v315 = vsel %vm247, %v237, 0
  %v318 = vsel %vm247, %v238, 0
  %v321 = vsel %vm247, %v239, 0
  %v324 = vsel %vm247, %v240, 0
  %v327 = vsel %vm247, %v241, 0
  %v330 = vsel %vm247, %v242, 0
  %v333 = vsel %vm247, %v243, 0
  %v336 = vsel %vm247, %v244, 0
  %v339 = vsel %vm247, %v245, 0
  %v342 = vsel %vm247, %v246, 0
  %vm344 = vcmask 1041408
  %v346 = vsel %vm344, %v79, 0
  %348 = vmatprep.subr.bf16.mxu0 0
  %349 = vmatpush1.bf16.msra.mxu0 %v346
  %350 = vmatprep.subr.bf16.mxu0 0
  %351 = vmatpush1.bf16.msra.mxu0 0
  %352 = vmatprep.subr.bf16.mxu0 0
  %353 = vmatpush1.bf16.msra.mxu0 0
  %354 = vmatprep.subr.bf16.mxu0 0
  %355 = vmatpush1.bf16.msra.mxu0 0
  %356 = vmatprep.subr.bf16.mxu0 0
  %357 = vmatpush1.bf16.msra.mxu0 0
  %358 = vmatprep.subr.bf16.mxu0 0
  %359 = vmatpush1.bf16.msra.mxu0 0
  %360 = vmatprep.subr.bf16.mxu0 0
  %361 = vmatpush1.bf16.msra.mxu0 0
  %362 = vmatprep.subr.bf16.mxu0 0
  %363 = vmatpush1.bf16.msra.mxu0 0
  %364 = vmatprep.subr.bf16.mxu0 0
  %365 = vmatpush1.bf16.msra.mxu0 0
  %366 = vmatprep.subr.bf16.mxu0 0
  %367 = vmatpush1.bf16.msra.mxu0 0
  %368 = vmatprep.subr.bf16.mxu0 0
  %369 = vmatpush1.bf16.msra.mxu0 0
  %370 = vmatprep.subr.bf16.mxu0 0
  %371 = vmatpush1.bf16.msra.mxu0 0
  %372 = vmatprep.subr.bf16.mxu0 0
  %373 = vmatpush1.bf16.msra.mxu0 0
  %374 = vmatprep.subr.bf16.mxu0 0
  %375 = vmatpush1.bf16.msra.mxu0 0
  %376 = vmatprep.subr.bf16.mxu0 0
  %377 = vmatpush1.bf16.msra.mxu0 0
  %378 = vmatprep.subr.bf16.mxu0 0
  %379 = vmatpush1.bf16.msra.mxu0 0
  %380 = vmatprep.mubr.bf16.mxu0 0
  %381 = vmatmul.mubr.bf16.gmra.mrb[0].mxu0 %v249
  %v382 = vpop.f32.mrb[0].mxu0
  %v383 = vadd.f32 %v85, %v382
  %v384 = vpop.f32.mrb[0].mxu0
  %v385 = vpop.f32.mrb[0].mxu0
  %v386 = vadd.f32 %v85, %v385
  %v387 = vpop.f32.mrb[0].mxu0
  %388 = vmatprep.mubr.bf16.mxu0 0
  %389 = vmatmul.mubr.bf16.gmra.mrb[0].mxu0 %v252
  %v390 = vpop.f32.mrb[0].mxu0
  %v391 = vadd.f32 %v85, %v390
  %v392 = vpop.f32.mrb[0].mxu0
  %v393 = vpop.f32.mrb[0].mxu0
  %v394 = vadd.f32 %v85, %v393
  %v395 = vpop.f32.mrb[0].mxu0
  %396 = vmatprep.mubr.bf16.mxu0 0
  %397 = vmatmul.mubr.bf16.gmra.mrb[0].mxu0 %v255
  %v398 = vpop.f32.mrb[0].mxu0
  %v399 = vadd.f32 %v85, %v398
  %v400 = vpop.f32.mrb[0].mxu0
  %v401 = vpop.f32.mrb[0].mxu0
  %v402 = vadd.f32 %v85, %v401
  %v403 = vpop.f32.mrb[0].mxu0
  %404 = vmatprep.mubr.bf16.mxu0 0
  %405 = vmatmul.mubr.bf16.gmra.mrb[0].mxu0 %v258
  %v406 = vpop.f32.mrb[0].mxu0
  %v407 = vadd.f32 %v85, %v406
  %v408 = vpop.f32.mrb[0].mxu0
  %v409 = vpop.f32.mrb[0].mxu0
  %v410 = vadd.f32 %v85, %v409
  %v411 = vpop.f32.mrb[0].mxu0
  %412 = vmatprep.mubr.bf16.mxu0 0
  %413 = vmatmul.mubr.bf16.gmra.mrb[0].mxu0 %v261
  %v414 = vpop.f32.mrb[0].mxu0
  %v415 = vadd.f32 %v85, %v414
  %v416 = vpop.f32.mrb[0].mxu0
  %v417 = vpop.f32.mrb[0].mxu0
  %v418 = vadd.f32 %v85, %v417
  %v419 = vpop.f32.mrb[0].mxu0
  %420 = vmatprep.mubr.bf16.mxu0 0
  %421 = vmatmul.mubr.bf16.gmra.mrb[0].mxu0 %v264
  %v422 = vpop.f32.mrb[0].mxu0
  %v423 = vadd.f32 %v85, %v422
  %v424 = vpop.f32.mrb[0].mxu0
  %v425 = vpop.f32.mrb[0].mxu0
  %v426 = vadd.f32 %v85, %v425
  %v427 = vpop.f32.mrb[0].mxu0
  %428 = vmatprep.mubr.bf16.mxu0 0
  %429 = vmatmul.mubr.bf16.gmra.mrb[0].mxu0 %v267
  %v430 = vpop.f32.mrb[0].mxu0
  %v431 = vadd.f32 %v85, %v430
  %v432 = vpop.f32.mrb[0].mxu0
  %v433 = vpop.f32.mrb[0].mxu0
  %v434 = vadd.f32 %v85, %v433
  %v435 = vpop.f32.mrb[0].mxu0
  %436 = vmatprep.mubr.bf16.mxu0 0
  %437 = vmatmul.mubr.bf16.gmra.mrb[0].mxu0 %v270
  %v438 = vpop.f32.mrb[0].mxu0
  %v439 = vadd.f32 %v85, %v438
  %v440 = vpop.f32.mrb[0].mxu0
  %v441 = vpop.f32.mrb[0].mxu0
  %v442 = vadd.f32 %v85, %v441
  %v443 = vpop.f32.mrb[0].mxu0
  %444 = vmatprep.mubr.bf16.mxu0 0
  %445 = vmatmul.mubr.bf16.gmra.mrb[0].mxu0 %v273
  %v446 = vpop.f32.mrb[0].mxu0
  %v447 = vadd.f32 %v85, %v446
  %v448 = vpop.f32.mrb[0].mxu0
  %v449 = vpop.f32.mrb[0].mxu0
  %v450 = vadd.f32 %v85, %v449
  %v451 = vpop.f32.mrb[0].mxu0
  %452 = vmatprep.mubr.bf16.mxu0 0
  %453 = vmatmul.mubr.bf16.gmra.mrb[0].mxu0 %v276
  %v454 = vpop.f32.mrb[0].mxu0
  %v455 = vadd.f32 %v85, %v454
  %v456 = vpop.f32.mrb[0].mxu0
  %v457 = vpop.f32.mrb[0].mxu0
  %v458 = vadd.f32 %v85, %v457
  %v459 = vpop.f32.mrb[0].mxu0
  %460 = vmatprep.mubr.bf16.mxu0 0
  %461 = vmatmul.mubr.bf16.gmra.mrb[0].mxu0 %v279
  %v462 = vpop.f32.mrb[0].mxu0
  %v463 = vadd.f32 %v85, %v462
  %v464 = vpop.f32.mrb[0].mxu0
  %v465 = vpop.f32.mrb[0].mxu0
  %v466 = vadd.f32 %v85, %v465
  %v467 = vpop.f32.mrb[0].mxu0
  %468 = vmatprep.mubr.bf16.mxu0 0
  %469 = vmatmul.mubr.bf16.gmra.mrb[0].mxu0 %v282
  %v470 = vpop.f32.mrb[0].mxu0
  %v471 = vadd.f32 %v85, %v470
  %v472 = vpop.f32.mrb[0].mxu0
  %v473 = vpop.f32.mrb[0].mxu0
  %v474 = vadd.f32 %v85, %v473
  %v475 = vpop.f32.mrb[0].mxu0
  %476 = vmatprep.mubr.bf16.mxu0 0
  %477 = vmatmul.mubr.bf16.gmra.mrb[0].mxu0 %v285
  %v478 = vpop.f32.mrb[0].mxu0
  %v479 = vadd.f32 %v85, %v478
  %v480 = vpop.f32.mrb[0].mxu0
  %v481 = vpop.f32.mrb[0].mxu0
  %v482 = vadd.f32 %v85, %v481
  %v483 = vpop.f32.mrb[0].mxu0
  %484 = vmatprep.mubr.bf16.mxu0 0
  %485 = vmatmul.mubr.bf16.gmra.mrb[0].mxu0 %v288
  %v486 = vpop.f32.mrb[0].mxu0
  %v487 = vadd.f32 %v85, %v486
  %v488 = vpop.f32.mrb[0].mxu0
  %v489 = vpop.f32.mrb[0].mxu0
  %v490 = vadd.f32 %v85, %v489
  %v491 = vpop.f32.mrb[0].mxu0
  %492 = vmatprep.mubr.bf16.mxu0 0
  %493 = vmatmul.mubr.bf16.gmra.mrb[0].mxu0 %v291
  %v494 = vpop.f32.mrb[0].mxu0
  %v495 = vadd.f32 %v85, %v494
  %v496 = vpop.f32.mrb[0].mxu0
  %v497 = vpop.f32.mrb[0].mxu0
  %v498 = vadd.f32 %v85, %v497
  %v499 = vpop.f32.mrb[0].mxu0
  %500 = vmatprep.mubr.bf16.mxu0 0
  %501 = vmatmul.mubr.bf16.gmra.mrb[0].mxu0 %v294
  %v502 = vpop.f32.mrb[0].mxu0
  %v503 = vadd.f32 %v85, %v502
  %v504 = vpop.f32.mrb[0].mxu0
  %v505 = vpop.f32.mrb[0].mxu0
  %v506 = vadd.f32 %v85, %v505
  %v507 = vpop.f32.mrb[0].mxu0
  %508 = vmatprep.mubr.bf16.mxu0 0
  %509 = vmatmul.mubr.bf16.gmra.mrb[0].mxu0 %v297
  %v510 = vpop.f32.mrb[0].mxu0
  %v511 = vadd.f32 %v85, %v510
  %v512 = vpop.f32.mrb[0].mxu0
  %v513 = vpop.f32.mrb[0].mxu0
  %v514 = vadd.f32 %v85, %v513
  %v515 = vpop.f32.mrb[0].mxu0
  %516 = vmatprep.mubr.bf16.mxu0 0
  %517 = vmatmul.mubr.bf16.gmra.mrb[0].mxu0 %v300
  %v518 = vpop.f32.mrb[0].mxu0
  %v519 = vadd.f32 %v85, %v518
  %v520 = vpop.f32.mrb[0].mxu0
  %v521 = vpop.f32.mrb[0].mxu0
  %v522 = vadd.f32 %v85, %v521
  %v523 = vpop.f32.mrb[0].mxu0
  %524 = vmatprep.mubr.bf16.mxu0 0
  %525 = vmatmul.mubr.bf16.gmra.mrb[0].mxu0 %v303
  %v526 = vpop.f32.mrb[0].mxu0
  %v527 = vadd.f32 %v85, %v526
  %v528 = vpop.f32.mrb[0].mxu0
  %v529 = vpop.f32.mrb[0].mxu0
  %v530 = vadd.f32 %v85, %v529
  %v531 = vpop.f32.mrb[0].mxu0
  %532 = vmatprep.mubr.bf16.mxu0 0
  %533 = vmatmul.mubr.bf16.gmra.mrb[0].mxu0 %v306
  %v534 = vpop.f32.mrb[0].mxu0
  %v535 = vadd.f32 %v85, %v534
  %v536 = vpop.f32.mrb[0].mxu0
  %v537 = vpop.f32.mrb[0].mxu0
  %v538 = vadd.f32 %v85, %v537
  %v539 = vpop.f32.mrb[0].mxu0
  %540 = vmatprep.mubr.bf16.mxu0 0
  %541 = vmatmul.mubr.bf16.gmra.mrb[0].mxu0 %v309
  %v542 = vpop.f32.mrb[0].mxu0
  %v543 = vadd.f32 %v85, %v542
  %v544 = vpop.f32.mrb[0].mxu0
  %v545 = vpop.f32.mrb[0].mxu0
  %v546 = vadd.f32 %v85, %v545
  %v547 = vpop.f32.mrb[0].mxu0
  %548 = vmatprep.mubr.bf16.mxu0 0
  %549 = vmatmul.mubr.bf16.gmra.mrb[0].mxu0 %v312
  %v550 = vpop.f32.mrb[0].mxu0
  %v551 = vadd.f32 %v85, %v550
  %v552 = vpop.f32.mrb[0].mxu0
  %v553 = vpop.f32.mrb[0].mxu0
  %v554 = vadd.f32 %v85, %v553
  %v555 = vpop.f32.mrb[0].mxu0
  %556 = vmatprep.mubr.bf16.mxu0 0
  %557 = vmatmul.mubr.bf16.gmra.mrb[0].mxu0 %v315
  %v558 = vpop.f32.mrb[0].mxu0
  %v559 = vadd.f32 %v85, %v558
  %v560 = vpop.f32.mrb[0].mxu0
  %v561 = vpop.f32.mrb[0].mxu0
  %v562 = vadd.f32 %v85, %v561
  %v563 = vpop.f32.mrb[0].mxu0
  %564 = vmatprep.mubr.bf16.mxu0 0
  %565 = vmatmul.mubr.bf16.gmra.mrb[0].mxu0 %v318
  %v566 = vpop.f32.mrb[0].mxu0
  %v567 = vadd.f32 %v85, %v566
  %v568 = vpop.f32.mrb[0].mxu0
  %v569 = vpop.f32.mrb[0].mxu0
  %v570 = vadd.f32 %v85, %v569
  %v571 = vpop.f32.mrb[0].mxu0
  %572 = vmatprep.mubr.bf16.mxu0 0
  %573 = vmatmul.mubr.bf16.gmra.mrb[0].mxu0 %v321
  %v574 = vpop.f32.mrb[0].mxu0
  %v575 = vadd.f32 %v85, %v574
  %v576 = vpop.f32.mrb[0].mxu0
  %v577 = vpop.f32.mrb[0].mxu0
  %v578 = vadd.f32 %v85, %v577
  %v579 = vpop.f32.mrb[0].mxu0
  %580 = vmatprep.mubr.bf16.mxu0 0
  %581 = vmatmul.mubr.bf16.gmra.mrb[0].mxu0 %v324
  %v582 = vpop.f32.mrb[0].mxu0
  %v583 = vadd.f32 %v85, %v582
  %v584 = vpop.f32.mrb[0].mxu0
  %v585 = vpop.f32.mrb[0].mxu0
  %v586 = vadd.f32 %v85, %v585
  %v587 = vpop.f32.mrb[0].mxu0
  %588 = vmatprep.mubr.bf16.mxu0 0
  %589 = vmatmul.mubr.bf16.gmra.mrb[0].mxu0 %v327
  %v590 = vpop.f32.mrb[0].mxu0
  %v591 = vadd.f32 %v85, %v590
  %v592 = vpop.f32.mrb[0].mxu0
  %v593 = vpop.f32.mrb[0].mxu0
  %v594 = vadd.f32 %v85, %v593
  %v595 = vpop.f32.mrb[0].mxu0
  %596 = vmatprep.mubr.bf16.mxu0 0
  %597 = vmatmul.mubr.bf16.gmra.mrb[0].mxu0 %v330
  %v598 = vpop.f32.mrb[0].mxu0
  %v599 = vadd.f32 %v85, %v598
  %v600 = vpop.f32.mrb[0].mxu0
  %v601 = vpop.f32.mrb[0].mxu0
  %v602 = vadd.f32 %v85, %v601
  %v603 = vpop.f32.mrb[0].mxu0
  %604 = vmatprep.mubr.bf16.mxu0 0
  %605 = vmatmul.mubr.bf16.gmra.mrb[0].mxu0 %v333
  %v606 = vpop.f32.mrb[0].mxu0
  %v607 = vadd.f32 %v85, %v606
  %v608 = vpop.f32.mrb[0].mxu0
  %v609 = vpop.f32.mrb[0].mxu0
  %v610 = vadd.f32 %v85, %v609
  %v611 = vpop.f32.mrb[0].mxu0
  %612 = vmatprep.mubr.bf16.mxu0 0
  %613 = vmatmul.mubr.bf16.gmra.mrb[0].mxu0 %v336
  %v614 = vpop.f32.mrb[0].mxu0
  %v615 = vadd.f32 %v85, %v614
  %v616 = vpop.f32.mrb[0].mxu0
  %v617 = vpop.f32.mrb[0].mxu0
  %v618 = vadd.f32 %v85, %v617
  %v619 = vpop.f32.mrb[0].mxu0
  %620 = vmatprep.mubr.bf16.mxu0 0
  %621 = vmatmul.mubr.bf16.gmra.mrb[0].mxu0 %v339
  %v622 = vpop.f32.mrb[0].mxu0
  %v623 = vadd.f32 %v85, %v622
  %v624 = vpop.f32.mrb[0].mxu0
  %v625 = vpop.f32.mrb[0].mxu0
  %v626 = vadd.f32 %v85, %v625
  %v627 = vpop.f32.mrb[0].mxu0
  %628 = vmatprep.mubr.bf16.mxu0 0
  %629 = vmatmul.mubr.bf16.gmra.mrb[0].mxu0 %v342
  %v630 = vpop.f32.mrb[0].mxu0
  %v631 = vadd.f32 %v85, %v630
  %v632 = vpop.f32.mrb[0].mxu0
  %v633 = vpop.f32.mrb[0].mxu0
  %v634 = vadd.f32 %v85, %v633
  %v635 = vpop.f32.mrb[0].mxu0
  %636 = vdwg.mxu0
  %v637 = vadd.f32 %v383, 3.0
  %v638 = vadd.f32 %v386, 3.0
  %v639 = vadd.f32 %v391, 3.0
  %v640 = vadd.f32 %v394, 3.0
  %v641 = vadd.f32 %v399, 3.0
  %v642 = vadd.f32 %v402, 3.0
  %v643 = vadd.f32 %v407, 3.0
  %v644 = vadd.f32 %v410, 3.0
  %v645 = vadd.f32 %v415, 3.0
  %v646 = vadd.f32 %v418, 3.0
  %v647 = vadd.f32 %v423, 3.0
  %v648 = vadd.f32 %v426, 3.0
  %v649 = vadd.f32 %v431, 3.0
  %v650 = vadd.f32 %v434, 3.0
  %v651 = vadd.f32 %v439, 3.0
  %v652 = vadd.f32 %v442, 3.0
  %v653 = vadd.f32 %v447, 3.0
  %v654 = vadd.f32 %v450, 3.0
  %v655 = vadd.f32 %v455, 3.0
  %v656 = vadd.f32 %v458, 3.0
  %v657 = vadd.f32 %v463, 3.0
  %v658 = vadd.f32 %v466, 3.0
  %v659 = vadd.f32 %v471, 3.0
  %v660 = vadd.f32 %v474, 3.0
  %v661 = vadd.f32 %v479, 3.0
  %v662 = vadd.f32 %v482, 3.0
  %v663 = vadd.f32 %v487, 3.0
  %v664 = vadd.f32 %v490, 3.0
  %v665 = vadd.f32 %v495, 3.0
  %v666 = vadd.f32 %v498, 3.0
  %v667 = vadd.f32 %v503, 3.0
  %v668 = vadd.f32 %v506, 3.0
  %v669 = vadd.f32 %v511, 3.0
  %v670 = vadd.f32 %v514, 3.0
  %v671 = vadd.f32 %v519, 3.0
  %v672 = vadd.f32 %v522, 3.0
  %v673 = vadd.f32 %v527, 3.0
  %v674 = vadd.f32 %v530, 3.0
  %v675 = vadd.f32 %v535, 3.0
  %v676 = vadd.f32 %v538, 3.0
  %v677 = vadd.f32 %v543, 3.0
  %v678 = vadd.f32 %v546, 3.0
  %v679 = vadd.f32 %v551, 3.0
  %v680 = vadd.f32 %v554, 3.0
  %v681 = vadd.f32 %v559, 3.0
  %v682 = vadd.f32 %v562, 3.0
  %v683 = vadd.f32 %v567, 3.0
  %v684 = vadd.f32 %v570, 3.0
  %v685 = vadd.f32 %v575, 3.0
  %v686 = vadd.f32 %v578, 3.0
  %v687 = vadd.f32 %v583, 3.0
  %v688 = vadd.f32 %v586, 3.0
  %v689 = vadd.f32 %v591, 3.0
  %v690 = vadd.f32 %v594, 3.0
  %v691 = vadd.f32 %v599, 3.0
  %v692 = vadd.f32 %v602, 3.0
  %v693 = vadd.f32 %v607, 3.0
  %v694 = vadd.f32 %v610, 3.0
  %v695 = vadd.f32 %v615, 3.0
  %v696 = vadd.f32 %v618, 3.0
  %v697 = vadd.f32 %v623, 3.0
  %v698 = vadd.f32 %v626, 3.0
  %v699 = vadd.f32 %v631, 3.0
  %v700 = vadd.f32 %v634, 3.0
  %v701 = vmax.f32 %v637, 0.0
  %v702 = vmax.f32 %v638, 0.0
  %v703 = vmax.f32 %v639, 0.0
  %v704 = vmax.f32 %v640, 0.0
  %v705 = vmax.f32 %v641, 0.0
  %v706 = vmax.f32 %v642, 0.0
  %v707 = vmax.f32 %v643, 0.0
  %v708 = vmax.f32 %v644, 0.0
  %v709 = vmax.f32 %v645, 0.0
  %v710 = vmax.f32 %v646, 0.0
  %v711 = vmax.f32 %v647, 0.0
  %v712 = vmax.f32 %v648, 0.0
  %v713 = vmax.f32 %v649, 0.0
  %v714 = vmax.f32 %v650, 0.0
  %v715 = vmax.f32 %v651, 0.0
  %v716 = vmax.f32 %v652, 0.0
  %v717 = vmax.f32 %v653, 0.0
  %v718 = vmax.f32 %v654, 0.0
  %v719 = vmax.f32 %v655, 0.0
  %v720 = vmax.f32 %v656, 0.0
  %v721 = vmax.f32 %v657, 0.0
  %v722 = vmax.f32 %v658, 0.0
  %v723 = vmax.f32 %v659, 0.0
  %v724 = vmax.f32 %v660, 0.0
  %v725 = vmax.f32 %v661, 0.0
  %v726 = vmax.f32 %v662, 0.0
  %v727 = vmax.f32 %v663, 0.0
  %v728 = vmax.f32 %v664, 0.0
  %v729 = vmax.f32 %v665, 0.0
  %v730 = vmax.f32 %v666, 0.0
  %v731 = vmax.f32 %v667, 0.0
  %v732 = vmax.f32 %v668, 0.0
  %v733 = vmax.f32 %v669, 0.0
  %v734 = vmax.f32 %v670, 0.0
  %v735 = vmax.f32 %v671, 0.0
  %v736 = vmax.f32 %v672, 0.0
  %v737 = vmax.f32 %v673, 0.0
  %v738 = vmax.f32 %v674, 0.0
  %v739 = vmax.f32 %v675, 0.0
  %v740 = vmax.f32 %v676, 0.0
  %v741 = vmax.f32 %v677, 0.0
  %v742 = vmax.f32 %v678, 0.0
  %v743 = vmax.f32 %v679, 0.0
  %v744 = vmax.f32 %v680, 0.0
  %v745 = vmax.f32 %v681, 0.0
  %v746 = vmax.f32 %v682, 0.0
  %v747 = vmax.f32 %v683, 0.0
  %v748 = vmax.f32 %v684, 0.0
  %v749 = vmax.f32 %v685, 0.0
  %v750 = vmax.f32 %v686, 0.0
  %v751 = vmax.f32 %v687, 0.0
  %v752 = vmax.f32 %v688, 0.0
  %v753 = vmax.f32 %v689, 0.0
  %v754 = vmax.f32 %v690, 0.0
  %v755 = vmax.f32 %v691, 0.0
  %v756 = vmax.f32 %v692, 0.0
  %v757 = vmax.f32 %v693, 0.0
  %v758 = vmax.f32 %v694, 0.0
  %v759 = vmax.f32 %v695, 0.0
  %v760 = vmax.f32 %v696, 0.0
  %v761 = vmax.f32 %v697, 0.0
  %v762 = vmax.f32 %v698, 0.0
  %v763 = vmax.f32 %v699, 0.0
  %v764 = vmax.f32 %v700, 0.0
  %v765 = vmin.f32 %v701, 6.0
  %v766 = vmin.f32 %v702, 6.0
  %v767 = vmin.f32 %v703, 6.0
  %v768 = vmin.f32 %v704, 6.0
  %v769 = vmin.f32 %v705, 6.0
  %v770 = vmin.f32 %v706, 6.0
  %v771 = vmin.f32 %v707, 6.0
  %v772 = vmin.f32 %v708, 6.0
  %v773 = vmin.f32 %v709, 6.0
  %v774 = vmin.f32 %v710, 6.0
  %v775 = vmin.f32 %v711, 6.0
  %v776 = vmin.f32 %v712, 6.0
  %v777 = vmin.f32 %v713, 6.0
  %v778 = vmin.f32 %v714, 6.0
  %v779 = vmin.f32 %v715, 6.0
  %v780 = vmin.f32 %v716, 6.0
  %v781 = vmin.f32 %v717, 6.0
  %v782 = vmin.f32 %v718, 6.0
  %v783 = vmin.f32 %v719, 6.0
  %v784 = vmin.f32 %v720, 6.0
  %v785 = vmin.f32 %v721, 6.0
  %v786 = vmin.f32 %v722, 6.0
  %v787 = vmin.f32 %v723, 6.0
  %v788 = vmin.f32 %v724, 6.0
  %v789 = vmin.f32 %v725, 6.0
  %v790 = vmin.f32 %v726, 6.0
  %v791 = vmin.f32 %v727, 6.0
  %v792 = vmin.f32 %v728, 6.0
  %v793 = vmin.f32 %v729, 6.0
  %v794 = vmin.f32 %v730, 6.0
  %v795 = vmin.f32 %v731, 6.0
  %v796 = vmin.f32 %v732, 6.0
  %v797 = vmin.f32 %v733, 6.0
  %v798 = vmin.f32 %v734, 6.0
  %v799 = vmin.f32 %v735, 6.0
  %v800 = vmin.f32 %v736, 6.0
  %v801 = vmin.f32 %v737, 6.0
  %v802 = vmin.f32 %v738, 6.0
  %v803 = vmin.f32 %v739, 6.0
  %v804 = vmin.f32 %v740, 6.0
  %v805 = vmin.f32 %v741, 6.0
  %v806 = vmin.f32 %v742, 6.0
  %v807 = vmin.f32 %v743, 6.0
  %v808 = vmin.f32 %v744, 6.0
  %v809 = vmin.f32 %v745, 6.0
  %v810 = vmin.f32 %v746, 6.0
  %v811 = vmin.f32 %v747, 6.0
  %v812 = vmin.f32 %v748, 6.0
  %v813 = vmin.f32 %v749, 6.0
  %v814 = vmin.f32 %v750, 6.0
  %v815 = vmin.f32 %v751, 6.0
  %v816 = vmin.f32 %v752, 6.0
  %v817 = vmin.f32 %v753, 6.0
  %v818 = vmin.f32 %v754, 6.0
  %v819 = vmin.f32 %v755, 6.0
  %v820 = vmin.f32 %v756, 6.0
  %v821 = vmin.f32 %v757, 6.0
  %v822 = vmin.f32 %v758, 6.0
  %v823 = vmin.f32 %v759, 6.0
  %v824 = vmin.f32 %v760, 6.0
  %v825 = vmin.f32 %v761, 6.0
  %v826 = vmin.f32 %v762, 6.0
  %v827 = vmin.f32 %v763, 6.0
  %v828 = vmin.f32 %v764, 6.0
  %v829 = vmul.f32 %v383, %v765
  %v830 = vmul.f32 %v386, %v766
  %v831 = vmul.f32 %v391, %v767
  %v832 = vmul.f32 %v394, %v768
  %v833 = vmul.f32 %v399, %v769
  %v834 = vmul.f32 %v402, %v770
  %v835 = vmul.f32 %v407, %v771
  %v836 = vmul.f32 %v410, %v772
  %v837 = vmul.f32 %v415, %v773
  %v838 = vmul.f32 %v418, %v774
  %v839 = vmul.f32 %v423, %v775
  %v840 = vmul.f32 %v426, %v776
  %v841 = vmul.f32 %v431, %v777
  %v842 = vmul.f32 %v434, %v778
  %v843 = vmul.f32 %v439, %v779
  %v844 = vmul.f32 %v442, %v780
  %v845 = vmul.f32 %v447, %v781
  %v846 = vmul.f32 %v450, %v782
  %v847 = vmul.f32 %v455, %v783
  %v848 = vmul.f32 %v458, %v784
  %v849 = vmul.f32 %v463, %v785
  %v850 = vmul.f32 %v466, %v786
  %v851 = vmul.f32 %v471, %v787
  %v852 = vmul.f32 %v474, %v788
  %v853 = vmul.f32 %v479, %v789
  %v854 = vmul.f32 %v482, %v790
  %v855 = vmul.f32 %v487, %v791
  %v856 = vmul.f32 %v490, %v792
  %v857 = vmul.f32 %v495, %v793
  %v858 = vmul.f32 %v498, %v794
  %v859 = vmul.f32 %v503, %v795
  %v860 = vmul.f32 %v506, %v796
  %v861 = vmul.f32 %v511, %v797
  %v862 = vmul.f32 %v514, %v798
  %v863 = vmul.f32 %v519, %v799
  %v864 = vmul.f32 %v522, %v800
  %v865 = vmul.f32 %v527, %v801
  %v866 = vmul.f32 %v530, %v802
  %v867 = vmul.f32 %v535, %v803
  %v868 = vmul.f32 %v538, %v804
  %v869 = vmul.f32 %v543, %v805
  %v870 = vmul.f32 %v546, %v806
  %v871 = vmul.f32 %v551, %v807
  %v872 = vmul.f32 %v554, %v808
  %v873 = vmul.f32 %v559, %v809
  %v874 = vmul.f32 %v562, %v810
  %v875 = vmul.f32 %v567, %v811
  %v876 = vmul.f32 %v570, %v812
  %v877 = vmul.f32 %v575, %v813
  %v878 = vmul.f32 %v578, %v814
  %v879 = vmul.f32 %v583, %v815
  %v880 = vmul.f32 %v586, %v816
  %v881 = vmul.f32 %v591, %v817
  %v882 = vmul.f32 %v594, %v818
  %v883 = vmul.f32 %v599, %v819
  %v884 = vmul.f32 %v602, %v820
  %v885 = vmul.f32 %v607, %v821
  %v886 = vmul.f32 %v610, %v822
  %v887 = vmul.f32 %v615, %v823
  %v888 = vmul.f32 %v618, %v824
  %v889 = vmul.f32 %v623, %v825
  %v890 = vmul.f32 %v626, %v826
  %v891 = vmul.f32 %v631, %v827
  %v892 = vmul.f32 %v634, %v828
  %v893 = vmul.f32 %v829, 0.16666667
  %v894 = vmul.f32 %v830, 0.16666667
  %v895 = vmul.f32 %v831, 0.16666667
  %v896 = vmul.f32 %v832, 0.16666667
  %v897 = vmul.f32 %v833, 0.16666667
  %v898 = vmul.f32 %v834, 0.16666667
  %v899 = vmul.f32 %v835, 0.16666667
  %v900 = vmul.f32 %v836, 0.16666667
  %v901 = vmul.f32 %v837, 0.16666667
  %v902 = vmul.f32 %v838, 0.16666667
  %v903 = vmul.f32 %v839, 0.16666667
  %v904 = vmul.f32 %v840, 0.16666667
  %v905 = vmul.f32 %v841, 0.16666667
  %v906 = vmul.f32 %v842, 0.16666667
  %v907 = vmul.f32 %v843, 0.16666667
  %v908 = vmul.f32 %v844, 0.16666667
  %v909 = vmul.f32 %v845, 0.16666667
  %v910 = vmul.f32 %v846, 0.16666667
  %v911 = vmul.f32 %v847, 0.16666667
  %v912 = vmul.f32 %v848, 0.16666667
  %v913 = vmul.f32 %v849, 0.16666667
  %v914 = vmul.f32 %v850, 0.16666667
  %v915 = vmul.f32 %v851, 0.16666667
  %v916 = vmul.f32 %v852, 0.16666667
  %v917 = vmul.f32 %v853, 0.16666667
  %v918 = vmul.f32 %v854, 0.16666667
  %v919 = vmul.f32 %v855, 0.16666667
  %v920 = vmul.f32 %v856, 0.16666667
  %v921 = vmul.f32 %v857, 0.16666667
  %v922 = vmul.f32 %v858, 0.16666667
  %v923 = vmul.f32 %v859, 0.16666667
  %v924 = vmul.f32 %v860, 0.16666667
  %v925 = vmul.f32 %v861, 0.16666667
  %v926 = vmul.f32 %v862, 0.16666667
  %v927 = vmul.f32 %v863, 0.16666667
  %v928 = vmul.f32 %v864, 0.16666667
  %v929 = vmul.f32 %v865, 0.16666667
  %v930 = vmul.f32 %v866, 0.16666667
  %v931 = vmul.f32 %v867, 0.16666667
  %v932 = vmul.f32 %v868, 0.16666667
  %v933 = vmul.f32 %v869, 0.16666667
  %v934 = vmul.f32 %v870, 0.16666667
  %v935 = vmul.f32 %v871, 0.16666667
  %v936 = vmul.f32 %v872, 0.16666667
  %v937 = vmul.f32 %v873, 0.16666667
  %v938 = vmul.f32 %v874, 0.16666667
  %v939 = vmul.f32 %v875, 0.16666667
  %v940 = vmul.f32 %v876, 0.16666667
  %v941 = vmul.f32 %v877, 0.16666667
  %v942 = vmul.f32 %v878, 0.16666667
  %v943 = vmul.f32 %v879, 0.16666667
  %v944 = vmul.f32 %v880, 0.16666667
  %v945 = vmul.f32 %v881, 0.16666667
  %v946 = vmul.f32 %v882, 0.16666667
  %v947 = vmul.f32 %v883, 0.16666667
  %v948 = vmul.f32 %v884, 0.16666667
  %v949 = vmul.f32 %v885, 0.16666667
  %v950 = vmul.f32 %v886, 0.16666667
  %v951 = vmul.f32 %v887, 0.16666667
  %v952 = vmul.f32 %v888, 0.16666667
  %v953 = vmul.f32 %v889, 0.16666667
  %v954 = vmul.f32 %v890, 0.16666667
  %v955 = vmul.f32 %v891, 0.16666667
  %v956 = vmul.f32 %v892, 0.16666667
  %v957 = vpack.c.bf16 %v894, %v893
  %v958 = vpack.c.bf16 %v896, %v895
  %v959 = vpack.c.bf16 %v898, %v897
  %v960 = vpack.c.bf16 %v900, %v899
  %v961 = vpack.c.bf16 %v902, %v901
  %v962 = vpack.c.bf16 %v904, %v903
  %v963 = vpack.c.bf16 %v906, %v905
  %v964 = vpack.c.bf16 %v908, %v907
  %v965 = vpack.c.bf16 %v910, %v909
  %v966 = vpack.c.bf16 %v912, %v911
  %v967 = vpack.c.bf16 %v914, %v913
  %v968 = vpack.c.bf16 %v916, %v915
  %v969 = vpack.c.bf16 %v918, %v917
  %v970 = vpack.c.bf16 %v920, %v919
  %v971 = vpack.c.bf16 %v922, %v921
  %v972 = vpack.c.bf16 %v924, %v923
  %v973 = vpack.c.bf16 %v926, %v925
  %v974 = vpack.c.bf16 %v928, %v927
  %v975 = vpack.c.bf16 %v930, %v929
  %v976 = vpack.c.bf16 %v932, %v931
  %v977 = vpack.c.bf16 %v934, %v933
  %v978 = vpack.c.bf16 %v936, %v935
  %v979 = vpack.c.bf16 %v938, %v937
  %v980 = vpack.c.bf16 %v940, %v939
  %v981 = vpack.c.bf16 %v942, %v941
  %v982 = vpack.c.bf16 %v944, %v943
  %v983 = vpack.c.bf16 %v946, %v945
  %v984 = vpack.c.bf16 %v948, %v947
  %v985 = vpack.c.bf16 %v950, %v949
  %v986 = vpack.c.bf16 %v952, %v951
  %v987 = vpack.c.bf16 %v954, %v953
  %v988 = vpack.c.bf16 %v956, %v955
  %v1021 = vunpack.c.l.b16 %v957
  %v1022 = vunpack.c.h.b16 %v957
  %v1023 = vunpack.c.l.b16 %v958
  %v1024 = vunpack.c.h.b16 %v958
  %v1025 = vunpack.c.l.b16 %v959
  %v1026 = vunpack.c.h.b16 %v959
  %v1027 = vunpack.c.l.b16 %v960
  %v1028 = vunpack.c.h.b16 %v960
  %v1029 = vunpack.c.l.b16 %v961
  %v1030 = vunpack.c.h.b16 %v961
  %v1031 = vunpack.c.l.b16 %v962
  %v1032 = vunpack.c.h.b16 %v962
  %v1033 = vunpack.c.l.b16 %v963
  %v1034 = vunpack.c.h.b16 %v963
  %v1035 = vunpack.c.l.b16 %v964
  %v1036 = vunpack.c.h.b16 %v964
  %v1037 = vunpack.c.l.b16 %v965
  %v1038 = vunpack.c.h.b16 %v965
  %v1039 = vunpack.c.l.b16 %v966
  %v1040 = vunpack.c.h.b16 %v966
  %v1041 = vunpack.c.l.b16 %v967
  %v1042 = vunpack.c.h.b16 %v967
  %v1043 = vunpack.c.l.b16 %v968
  %v1044 = vunpack.c.h.b16 %v968
  %v1045 = vunpack.c.l.b16 %v969
  %v1046 = vunpack.c.h.b16 %v969
  %v1047 = vunpack.c.l.b16 %v970
  %v1048 = vunpack.c.h.b16 %v970
  %v1049 = vunpack.c.l.b16 %v971
  %v1050 = vunpack.c.h.b16 %v971
  %v1051 = vunpack.c.l.b16 %v972
  %v1052 = vunpack.c.h.b16 %v972
  %v1053 = vunpack.c.l.b16 %v973
  %v1054 = vunpack.c.h.b16 %v973
  %v1055 = vunpack.c.l.b16 %v974
  %v1056 = vunpack.c.h.b16 %v974
  %v1057 = vunpack.c.l.b16 %v975
  %v1058 = vunpack.c.h.b16 %v975
  %v1059 = vunpack.c.l.b16 %v976
  %v1060 = vunpack.c.h.b16 %v976
  %v1061 = vunpack.c.l.b16 %v977
  %v1062 = vunpack.c.h.b16 %v977
  %v1063 = vunpack.c.l.b16 %v978
  %v1064 = vunpack.c.h.b16 %v978
  %v1065 = vunpack.c.l.b16 %v979
  %v1066 = vunpack.c.h.b16 %v979
  %v1067 = vunpack.c.l.b16 %v980
  %v1068 = vunpack.c.h.b16 %v980
  %v1069 = vunpack.c.l.b16 %v981
  %v1070 = vunpack.c.h.b16 %v981
  %v1071 = vunpack.c.l.b16 %v982
  %v1072 = vunpack.c.h.b16 %v982
  %v1073 = vunpack.c.l.b16 %v983
  %v1074 = vunpack.c.h.b16 %v983
  %v1075 = vunpack.c.l.b16 %v984
  %v1076 = vunpack.c.h.b16 %v984
  %v1077 = vunpack.c.l.b16 %v985
  %v1078 = vunpack.c.h.b16 %v985
  %v1079 = vunpack.c.l.b16 %v986
  %v1080 = vunpack.c.h.b16 %v986
  %v1081 = vunpack.c.l.b16 %v987
  %v1082 = vunpack.c.h.b16 %v987
  %v1083 = vunpack.c.l.b16 %v988
  %v1084 = vunpack.c.h.b16 %v988
  %v1085 = vpack.c.b16 %v1021, %v1021
  %v1086 = vpack.c.b16 %v1022, %v1022
  %v1087 = vpack.c.b16 %v1023, %v1023
  %v1088 = vpack.c.b16 %v1024, %v1024
  %v1089 = vpack.c.b16 %v1025, %v1025
  %v1090 = vpack.c.b16 %v1026, %v1026
  %v1091 = vpack.c.b16 %v1027, %v1027
  %v1092 = vpack.c.b16 %v1028, %v1028
  %v1093 = vpack.c.b16 %v1029, %v1029
  %v1094 = vpack.c.b16 %v1030, %v1030
  %v1095 = vpack.c.b16 %v1031, %v1031
  %v1096 = vpack.c.b16 %v1032, %v1032
  %v1097 = vpack.c.b16 %v1033, %v1033
  %v1098 = vpack.c.b16 %v1034, %v1034
  %v1099 = vpack.c.b16 %v1035, %v1035
  %v1100 = vpack.c.b16 %v1036, %v1036
  %v1101 = vpack.c.b16 %v1037, %v1037
  %v1102 = vpack.c.b16 %v1038, %v1038
  %v1103 = vpack.c.b16 %v1039, %v1039
  %v1104 = vpack.c.b16 %v1040, %v1040
  %v1105 = vpack.c.b16 %v1041, %v1041
  %v1106 = vpack.c.b16 %v1042, %v1042
  %v1107 = vpack.c.b16 %v1043, %v1043
  %v1108 = vpack.c.b16 %v1044, %v1044
  %v1109 = vpack.c.b16 %v1045, %v1045
  %v1110 = vpack.c.b16 %v1046, %v1046
  %v1111 = vpack.c.b16 %v1047, %v1047
  %v1112 = vpack.c.b16 %v1048, %v1048
  %v1113 = vpack.c.b16 %v1049, %v1049
  %v1114 = vpack.c.b16 %v1050, %v1050
  %v1115 = vpack.c.b16 %v1051, %v1051
  %v1116 = vpack.c.b16 %v1052, %v1052
  %v1117 = vpack.c.b16 %v1053, %v1053
  %v1118 = vpack.c.b16 %v1054, %v1054
  %v1119 = vpack.c.b16 %v1055, %v1055
  %v1120 = vpack.c.b16 %v1056, %v1056
  %v1121 = vpack.c.b16 %v1057, %v1057
  %v1122 = vpack.c.b16 %v1058, %v1058
  %v1123 = vpack.c.b16 %v1059, %v1059
  %v1124 = vpack.c.b16 %v1060, %v1060
  %v1125 = vpack.c.b16 %v1061, %v1061
  %v1126 = vpack.c.b16 %v1062, %v1062
  %v1127 = vpack.c.b16 %v1063, %v1063
  %v1128 = vpack.c.b16 %v1064, %v1064
  %v1129 = vpack.c.b16 %v1065, %v1065
  %v1130 = vpack.c.b16 %v1066, %v1066
  %v1131 = vpack.c.b16 %v1067, %v1067
  %v1132 = vpack.c.b16 %v1068, %v1068
  %v1133 = vpack.c.b16 %v1069, %v1069
  %v1134 = vpack.c.b16 %v1070, %v1070
  %v1135 = vpack.c.b16 %v1071, %v1071
  %v1136 = vpack.c.b16 %v1072, %v1072
  %v1137 = vpack.c.b16 %v1073, %v1073
  %v1138 = vpack.c.b16 %v1074, %v1074
  %v1139 = vpack.c.b16 %v1075, %v1075
  %v1140 = vpack.c.b16 %v1076, %v1076
  %v1141 = vpack.c.b16 %v1077, %v1077
  %v1142 = vpack.c.b16 %v1078, %v1078
  %v1143 = vpack.c.b16 %v1079, %v1079
  %v1144 = vpack.c.b16 %v1080, %v1080
  %v1145 = vpack.c.b16 %v1081, %v1081
  %v1146 = vpack.c.b16 %v1082, %v1082
  %v1147 = vpack.c.b16 %v1083, %v1083
  %v1148 = vpack.c.b16 %v1084, %v1084
  %vm1213 = vcmask 27648
  %1214 = vst.msk [vmem:[%s3] sm:$0xf] %vm1213, %v1085
  %1215 = vst.msk [vmem:[%s3 + $0x4] sm:$0xf] %vm1213, %v1086
  %1216 = vst.msk [vmem:[%s3 + $0x8] sm:$0xf] %vm1213, %v1087
  %1217 = vst.msk [vmem:[%s3 + $0xc] sm:$0xf] %vm1213, %v1088
  %1218 = vst.msk [vmem:[%s3 + $0x10] sm:$0xf] %vm1213, %v1089
  %1219 = vst.msk [vmem:[%s3 + $0x14] sm:$0xf] %vm1213, %v1090
  %1220 = vst.msk [vmem:[%s3 + $0x18] sm:$0xf] %vm1213, %v1091
  %1221 = vst.msk [vmem:[%s3 + $0x1c] sm:$0xf] %vm1213, %v1092
  %1222 = vst.msk [vmem:[%s3 + $0x20] sm:$0xf] %vm1213, %v1093
  %1223 = vst.msk [vmem:[%s3 + $0x24] sm:$0xf] %vm1213, %v1094
  %1224 = vst.msk [vmem:[%s3 + $0x28] sm:$0xf] %vm1213, %v1095
  %1225 = vst.msk [vmem:[%s3 + $0x2c] sm:$0xf] %vm1213, %v1096
  %1226 = vst.msk [vmem:[%s3 + $0x30] sm:$0xf] %vm1213, %v1097
  %1227 = vst.msk [vmem:[%s3 + $0x34] sm:$0xf] %vm1213, %v1098
  %1228 = vst.msk [vmem:[%s3 + $0x38] sm:$0xf] %vm1213, %v1099
  %1229 = vst.msk [vmem:[%s3 + $0x3c] sm:$0xf] %vm1213, %v1100
  %1230 = vst.msk [vmem:[%s3 + $0x40] sm:$0xf] %vm1213, %v1101
  %1231 = vst.msk [vmem:[%s3 + $0x44] sm:$0xf] %vm1213, %v1102
  %1232 = vst.msk [vmem:[%s3 + $0x48] sm:$0xf] %vm1213, %v1103
  %1233 = vst.msk [vmem:[%s3 + $0x4c] sm:$0xf] %vm1213, %v1104
  %1234 = vst.msk [vmem:[%s3 + $0x50] sm:$0xf] %vm1213, %v1105
  %1235 = vst.msk [vmem:[%s3 + $0x54] sm:$0xf] %vm1213, %v1106
  %1236 = vst.msk [vmem:[%s3 + $0x58] sm:$0xf] %vm1213, %v1107
  %1237 = vst.msk [vmem:[%s3 + $0x5c] sm:$0xf] %vm1213, %v1108
  %1238 = vst.msk [vmem:[%s3 + $0x60] sm:$0xf] %vm1213, %v1109
  %1239 = vst.msk [vmem:[%s3 + $0x64] sm:$0xf] %vm1213, %v1110
  %1240 = vst.msk [vmem:[%s3 + $0x68] sm:$0xf] %vm1213, %v1111
  %1241 = vst.msk [vmem:[%s3 + $0x6c] sm:$0xf] %vm1213, %v1112
  %1242 = vst.msk [vmem:[%s3 + $0x70] sm:$0xf] %vm1213, %v1113
  %1243 = vst.msk [vmem:[%s3 + $0x74] sm:$0xf] %vm1213, %v1114
  %1244 = vst.msk [vmem:[%s3 + $0x78] sm:$0xf] %vm1213, %v1115
  %1245 = vst.msk [vmem:[%s3 + $0x7c] sm:$0xf] %vm1213, %v1116
  %1246 = vst.msk [vmem:[%s3 + $0x80] sm:$0xf] %vm1213, %v1117
  %1247 = vst.msk [vmem:[%s3 + $0x84] sm:$0xf] %vm1213, %v1118
  %1248 = vst.msk [vmem:[%s3 + $0x88] sm:$0xf] %vm1213, %v1119
  %1249 = vst.msk [vmem:[%s3 + $0x8c] sm:$0xf] %vm1213, %v1120
  %1250 = vst.msk [vmem:[%s3 + $0x90] sm:$0xf] %vm1213, %v1121
  %1251 = vst.msk [vmem:[%s3 + $0x94] sm:$0xf] %vm1213, %v1122
  %1252 = vst.msk [vmem:[%s3 + $0x98] sm:$0xf] %vm1213, %v1123
  %1253 = vst.msk [vmem:[%s3 + $0x9c] sm:$0xf] %vm1213, %v1124
  %1254 = vst.msk [vmem:[%s3 + $0xa0] sm:$0xf] %vm1213, %v1125
  %1255 = vst.msk [vmem:[%s3 + $0xa4] sm:$0xf] %vm1213, %v1126
  %1256 = vst.msk [vmem:[%s3 + $0xa8] sm:$0xf] %vm1213, %v1127
  %1257 = vst.msk [vmem:[%s3 + $0xac] sm:$0xf] %vm1213, %v1128
  %1258 = vst.msk [vmem:[%s3 + $0xb0] sm:$0xf] %vm1213, %v1129
  %1259 = vst.msk [vmem:[%s3 + $0xb4] sm:$0xf] %vm1213, %v1130
  %1260 = vst.msk [vmem:[%s3 + $0xb8] sm:$0xf] %vm1213, %v1131
  %1261 = vst.msk [vmem:[%s3 + $0xbc] sm:$0xf] %vm1213, %v1132
  %1262 = vst.msk [vmem:[%s3 + $0xc0] sm:$0xf] %vm1213, %v1133
  %1263 = vst.msk [vmem:[%s3 + $0xc4] sm:$0xf] %vm1213, %v1134
  %1264 = vst.msk [vmem:[%s3 + $0xc8] sm:$0xf] %vm1213, %v1135
  %1265 = vst.msk [vmem:[%s3 + $0xcc] sm:$0xf] %vm1213, %v1136
  %1266 = vst.msk [vmem:[%s3 + $0xd0] sm:$0xf] %vm1213, %v1137
  %1267 = vst.msk [vmem:[%s3 + $0xd4] sm:$0xf] %vm1213, %v1138
  %1268 = vst.msk [vmem:[%s3 + $0xd8] sm:$0xf] %vm1213, %v1139
  %1269 = vst.msk [vmem:[%s3 + $0xdc] sm:$0xf] %vm1213, %v1140
  %1270 = vst.msk [vmem:[%s3 + $0xe0] sm:$0xf] %vm1213, %v1141
  %1271 = vst.msk [vmem:[%s3 + $0xe4] sm:$0xf] %vm1213, %v1142
  %1272 = vst.msk [vmem:[%s3 + $0xe8] sm:$0xf] %vm1213, %v1143
  %1273 = vst.msk [vmem:[%s3 + $0xec] sm:$0xf] %vm1213, %v1144
  %1274 = vst.msk [vmem:[%s3 + $0xf0] sm:$0xf] %vm1213, %v1145
  %1275 = vst.msk [vmem:[%s3 + $0xf4] sm:$0xf] %vm1213, %v1146
  %1276 = vst.msk [vmem:[%s3 + $0xf8] sm:$0xf] %vm1213, %v1147
  %1277 = vst.msk [vmem:[%s3 + $0xfc] sm:$0xf] %vm1213, %v1148
  // Predicated region
  $region14: #{tpu_custom_call.1} parent=0 // pred_check
    _
  $region15: #{tpu_custom_call.1} parent=0 // pred_check_branch
    %1279 = sbr.rel (0) target = $region17
  $region16: #{tpu_custom_call.1} parent=0 // pred_region
    _
  $region17: #{tpu_custom_call.1} parent=0 // pred_fallthru
    _
  // Predicated region
  $region18: #{tpu_custom_call.1} parent=0 // pred_check
    _
  $region19: #{tpu_custom_call.1} parent=0 // pred_check_branch
    %1281 = sbr.rel (0) target = $region21
  $region20: #{tpu_custom_call.1} parent=0 // pred_region
    _
  $region21: #{tpu_custom_call.1} parent=0 // pred_fallthru
    _

</llo_original>
